<compile_context>
chip_gen: v6e
topology: v6e:2x2x1
jax: 0.10.0
libtpu: 0.0.40
codegen_flags: <defaults>
</compile_context>

<pallas_src>
import jax
import jax.numpy as jnp
from jax.experimental import pallas as pl
from jax.experimental.pallas import tpu as pltpu


def _abs_pos_emb_kernel(q_ref, emb_ref, o_ref):
    # q_ref   : (TM, D)  VMEM block of flattened queries (M = B*heads*I)
    # emb_ref : (D, J)   pre-built, pre-transposed positional embedding (resident)
    # o_ref   : (TM, J)  output block (exact J, no lane padding)
    o_ref[...] = jnp.dot(
        q_ref[...], emb_ref[...], preferred_element_type=jnp.float32
    ).astype(o_ref.dtype)


def _round_up(x, m):
    return ((x + m - 1) // m) * m


def _num_tensorcores():
    """Heuristic: 1 TC on v5e/v6e (and older per-core devices), 2 on v7x/v4."""
    try:
        kind = jax.devices()[0].device_kind.lower()
    except Exception:
        return 2  # safe default: keep >= 2 parallel grid steps
    for tag in ("v5 lite", "v5e", "v5litepod", "v6 lite", "v6e", "v2", "v3"):
        if tag in kind:
            return 1
    return 2


def abs_pos_emb(q, height, width, *, compute_dtype=None, out_dtype=jnp.float32, tm=None):
    """q: (B, heads, I, D); height: (H, D); width: (W, D) -> (B, heads, I, H*W)."""
    B, NH, I, D = q.shape
    H, Dh = height.shape
    W, Dw = width.shape
    assert D == Dh == Dw
    J = H * W
    M = B * NH * I

    cdt = q.dtype if compute_dtype is None else compute_dtype

    # --- hoisted once, outside the kernel grid (pure glue / layout plumbing) ---
    # emb[h*W + w, d] = height[h, d] + width[w, d]; pre-transposed for the MXU.
    emb = (height[:, None, :] + width[None, :, :]).reshape(J, D)
    emb_t = emb.T.astype(cdt)                    # (D, J)
    q2 = q.reshape(M, D).astype(cdt)             # (M, D)

    if tm is None:
        n_tc = _num_tensorcores()
        if n_tc <= 1 or M <= 8:
            tm = M                               # single grid step on 1-TC chips
        else:
            tm = min(_round_up(pl.cdiv(M, n_tc), 8), M)   # >= 2 parallel steps on v7x
    grid_m = pl.cdiv(M, tm)

    out = pl.pallas_call(
        _abs_pos_emb_kernel,
        out_shape=jax.ShapeDtypeStruct((M, J), out_dtype),
        grid_spec=pltpu.PrefetchScalarGridSpec(
            num_scalar_prefetch=0,
            grid=(grid_m,),
            in_specs=[
                pl.BlockSpec((tm, D), lambda m: (m, 0)),   # q tile
                pl.BlockSpec((D, J), lambda m: (0, 0)),    # emb (constant -> resident)
            ],
            out_specs=pl.BlockSpec((tm, J), lambda m: (m, 0)),
        ),
        compiler_params=pltpu.CompilerParams(
            dimension_semantics=("parallel",),
        ),
    )(q2, emb_t)

    return out.reshape(B, NH, I, J)


def abs_pos_emb_reference(q, height, width):
    emb = height[:, None, :] + width[None, :, :]
    emb = emb.reshape(-1, emb.shape[-1])
    return jnp.einsum('bhid,jd->bhij', q, emb)


if __name__ == "__main__":
    # Module config: fmap_size=8 -> H=W=8, dim_head=32
    fmap_size = 8
    dim_head = 32
    H = W = fmap_size
    I = H * W            # query sequence length = number of spatial positions
    B, NH = 2, 4         # batch, heads

    key = jax.random.PRNGKey(0)
    k_q, k_h, k_w = jax.random.split(key, 3)

    scale = dim_head ** (-0.5)
    # deterministic parameter init (mirrors torch.randn(...) * scale)
    height = jax.random.normal(k_h, (H, dim_head), dtype=jnp.float32) * scale
    width = jax.random.normal(k_w, (W, dim_head), dtype=jnp.float32) * scale
    q = jax.random.normal(k_q, (B, NH, I, dim_head), dtype=jnp.float32)

    ref = abs_pos_emb_reference(q, height, width)

    # f32 path: matches the pure-f32 torch reference at tight tolerance.
    logits = jax.block_until_ready(abs_pos_emb(q, height, width))
    assert logits.shape == (B, NH, I, H * W)
    assert jnp.allclose(logits, ref, atol=1e-5, rtol=1e-5)

    # bf16-operand path (perf option for v6e/v7x): f32 accumulation / f32 output,
    # looser tolerance since operands are rounded to bf16.
    logits_bf16 = jax.block_until_ready(
        abs_pos_emb(q, height, width, compute_dtype=jnp.bfloat16))
    assert logits_bf16.shape == (B, NH, I, H * W)
    assert jnp.allclose(logits_bf16, ref, atol=5e-2, rtol=5e-2)

    print("KERNEL_OK")
</pallas_src>

<mosaic_0001>
module attributes {stable_mosaic.version = 11 : i64} {
  func.func @_abs_pos_emb_kernel(%arg0: i32, %arg1: memref<256x32xf32, #tpu.memory_space<vmem>>, %arg2: memref<32x64xf32, #tpu.memory_space<vmem>>, %arg3: memref<256x64xf32, #tpu.memory_space<vmem>>) attributes {dimension_semantics = [#tpu.dimension_semantics<parallel>], iteration_bounds = array<i64: 2>, scalar_prefetch = 0 : i64, scratch_operands = 0 : i64, tpu.core_type = #tpu.core_type<tc>, window_params = [{transform_indices = @transform_0, window_bounds = array<i64: 256, 32>}, {pipeline_mode = #tpu.pipeline_mode<synchronous>, transform_indices = @transform_1, window_bounds = array<i64: 32, 64>}, {transform_indices = @transform_2, window_bounds = array<i64: 256, 64>}]} {
    %c0 = arith.constant 0 : index
    %c0_0 = arith.constant 0 : index
    %0 = vector.load %arg1[%c0, %c0_0] : memref<256x32xf32, #tpu.memory_space<vmem>>, vector<256x32xf32>
    %c0_1 = arith.constant 0 : index
    %c0_2 = arith.constant 0 : index
    %1 = vector.load %arg2[%c0_1, %c0_2] : memref<32x64xf32, #tpu.memory_space<vmem>>, vector<32x64xf32>
    %cst = arith.constant dense<0.000000e+00> : vector<256x64xf32>
    %2 = tpu.matmul %0, %1, %cst {dimension_numbers = #tpu.dot_dimension_numbers<[1], [0], [0], [1], [0, 0, 1, 1], [], []>} : vector<256x32xf32>, vector<32x64xf32>, vector<256x64xf32> -> vector<256x64xf32>
    %c0_3 = arith.constant 0 : index
    %c0_4 = arith.constant 0 : index
    %3 = vector.load %arg3[%c0_3, %c0_4] : memref<256x64xf32, #tpu.memory_space<vmem>>, vector<256x64xf32>
    tpu.vector_store %arg3[%c0_3, %c0_4], %2 {strides = array<i32>} : memref<256x64xf32, #tpu.memory_space<vmem>>, vector<256x64xf32>,
    return
  }
  func.func @transform_0(%arg0: i32) -> (i32, i32) {
    %c0_i32 = arith.constant 0 : i32
    %c0_i32_0 = arith.constant 0 : i32
    return %arg0, %c0_i32 : i32, i32
  }
  func.func @transform_1(%arg0: i32) -> (i32, i32) {
    %c0_i32 = arith.constant 0 : i32
    %c0_i32_0 = arith.constant 0 : i32
    %c0_i32_1 = arith.constant 0 : i32
    return %c0_i32, %c0_i32_0 : i32, i32
  }
  func.func @transform_2(%arg0: i32) -> (i32, i32) {
    %c0_i32 = arith.constant 0 : i32
    %c0_i32_0 = arith.constant 0 : i32
    return %arg0, %c0_i32 : i32, i32
  }
}

</mosaic_0001>

<llo_original>
// kernel: tpu_custom_call.1
$region0: #{tpu_custom_call.1}
  #allocation0 [shape = 'u32[]', space=smem, size = 0x4, offset = 0x4, fixed_abs, tag = 'smem constant byte address 0x4 - core index']
  #allocation1 [shape = 'u32[144,128]{1,0:T(1,128)}', space=vmem, size = 0x12000, scoped, tag = 'internal scratch']
  %s0 = inlined_call_operand.vmem [shape: f32[512,32], index: 0, kind: input, shape index: {}]
  %s1 = inlined_call_operand.vmem [shape: f32[32,64], index: 1, kind: input, shape index: {}]
  %s2 = inlined_call_operand.vmem [shape: f32[512,64], index: 2, kind: output, shape index: {}]
  %s3 = sld [smem:[#allocation0]]
  $region41: #{tpu_custom_call.1} parent=0
    _
  %s5 = ssub.s32 1, %s3
  %s6 = scalar_select 0, %s5, %s3
  loop: start=0, step=1, limit=4
  $region2: #{tpu_custom_call.1} parent=0 // loop_pre_header
    _
  $region3: #{tpu_custom_call.1} parent=0 // loop_header
    %s8 = sphi 0, %s12
    %p9 = scmp.ge.s32.totalorder %s8, 4
    %s18 = sphi 0, %s20
    %s21 = sphi 0, %s18
    %s22 = sphi 0, %s21
    %s38 = sphi 0, %s22
    %s42 = sphi 0, %s42
    %s44 = sphi 0, %s42
    %s45 = sphi 0, %s44
    %s59 = sphi 0, %s45
    %s65 = sphi 0, %s67
    %s68 = sphi 0, %s65
    %s69 = sphi 0, %s68
    %s85 = sphi 0, %s69
  $region4: #{tpu_custom_call.1} parent=0 // loop_header_branch
    %11 = sbr.rel (%p9) target = $region8
  $region5: #{tpu_custom_call.1} parent=0 // loop_body
    %s13 = ssub.s32 %s8, 1
    %s14 = ssub.s32 %s8, 2
    %s15 = sadd.s32 %s8, 1
    %s16 = ssub.s32 %s8, %s15
    %p17 = scmp.eq.s32.totalorder %s16, 0
    %s19 = sadd.s32 %s18, 1
    %s20 = scalar_select %p17, %s18, %s19
    %p23 = pneg %p17
    %p24 = scmp.eq.s32.totalorder %s8, 1
    %p25 = por %p23, %p24
    %p26 = scmp.ne.s32.totalorder %s18, %s21
    %p27 = scmp.eq.s32.totalorder %s8, 0
    %p28 = por %p26, %p27
    %p29 = scmp.ne.s32.totalorder %s18, %s21
    %p30 = scmp.eq.s32.totalorder %s13, 1
    %p31 = por %p29, %p30
    %p32 = scmp.ne.s32.totalorder %s21, %s22
    %p33 = scmp.eq.s32.totalorder %s13, 0
    %p34 = por %p32, %p33
    %p35 = scmp.ne.s32.totalorder %s21, %s22
    %p36 = scmp.eq.s32.totalorder %s14, 1
    %p37 = por %p35, %p36
    %p39 = scmp.ne.s32.totalorder %s22, %s38
    %p40 = scmp.eq.s32.totalorder %s14, 0
    %p41 = por %p39, %p40
    %s43 = sadd.s32 %s42, 1
    %p46 = scmp.eq.s32.totalorder %s8, 1
    %p47 = scmp.ne.s32.totalorder %s42, %s44
    %p48 = scmp.eq.s32.totalorder %s8, 0
    %p49 = por %p47, %p48
    %p50 = scmp.ne.s32.totalorder %s42, %s44
    %p51 = scmp.eq.s32.totalorder %s13, 1
    %p52 = por %p50, %p51
    %p53 = scmp.ne.s32.totalorder %s44, %s45
    %p54 = scmp.eq.s32.totalorder %s13, 0
    %p55 = por %p53, %p54
    %p56 = scmp.ne.s32.totalorder %s44, %s45
    %p57 = scmp.eq.s32.totalorder %s14, 1
    %p58 = por %p56, %p57
    %p60 = scmp.ne.s32.totalorder %s45, %s59
    %p61 = scmp.eq.s32.totalorder %s14, 0
    %p62 = por %p60, %p61
    %s63 = ssub.s32 %s8, %s15
    %p64 = scmp.eq.s32.totalorder %s63, 0
    %s66 = sadd.s32 %s65, 1
    %s67 = scalar_select %p64, %s65, %s66
    %p70 = pneg %p64
    %p71 = scmp.eq.s32.totalorder %s8, 1
    %p72 = por %p70, %p71
    %p73 = scmp.ne.s32.totalorder %s65, %s68
    %p74 = scmp.eq.s32.totalorder %s8, 0
    %p75 = por %p73, %p74
    %p76 = scmp.ne.s32.totalorder %s65, %s68
    %p77 = scmp.eq.s32.totalorder %s13, 1
    %p78 = por %p76, %p77
    %p79 = scmp.ne.s32.totalorder %s68, %s69
    %p80 = scmp.eq.s32.totalorder %s13, 0
    %p81 = por %p79, %p80
    %p82 = scmp.ne.s32.totalorder %s68, %s69
    %p83 = scmp.eq.s32.totalorder %s14, 1
    %p84 = por %p82, %p83
    %p86 = scmp.ne.s32.totalorder %s69, %s85
    %p87 = scmp.eq.s32.totalorder %s14, 0
    %p88 = por %p86, %p87
    %p89 = scmp.le.s32.totalorder 1, %s8
    %p90 = scmp.lt.s32.totalorder %s8, 3
    %p91 = pnand %p89, %p90
    %p92 = pneg %p91
    // Predicated region
    $region9: #{tpu_custom_call.1} parent=5 // pred_check
      _
    $region10: #{tpu_custom_call.1} parent=5 // pred_check_branch
      %94 = sbr.rel (%p91) target = $region12
    $region11: #{tpu_custom_call.1} parent=5 // pred_region
      %s95 = ssub.s32 %s8, 1
      // Predicated region
      $region13: #{tpu_custom_call.1} parent=11 // pred_check
        %p96 = pneg %p55
      $region14: #{tpu_custom_call.1} parent=11 // pred_check_branch
        %98 = sbr.rel (%p96) target = $region16
      $region15: #{tpu_custom_call.1} parent=11 // pred_region
        _
      $region16: #{tpu_custom_call.1} parent=11 // pred_fallthru
        _
    $region12: #{tpu_custom_call.1} parent=5 // pred_fallthru
      _
    %p99 = scmp.lt.s32.totalorder %s8, 2
    // Predicated region
    $region17: #{tpu_custom_call.1} parent=5 // pred_check
      %p100 = pneg %p99
    $region18: #{tpu_custom_call.1} parent=5 // pred_check_branch
      %102 = sbr.rel (%p100) target = $region20
    $region19: #{tpu_custom_call.1} parent=5 // pred_region
      // Predicated region
      $region21: #{tpu_custom_call.1} parent=19 // pred_check
        %p103 = pneg %p28
      $region22: #{tpu_custom_call.1} parent=19 // pred_check_branch
        %105 = sbr.rel (%p103) target = $region24
      $region23: #{tpu_custom_call.1} parent=19 // pred_region
        %s106 = smul.u32 32, %s8
        %p107 = scmp.lt.s32.totalorder %s106, 63
        %s108 = scalar_select %p107, %s106, 63
        %s109 = smul.addr %s108, 8
        %s110 = scalar_lea.vmem %s0, %s109
        %s111 = smul.u32 32, %s8
      $region24: #{tpu_custom_call.1} parent=19 // pred_fallthru
        _
    $region20: #{tpu_custom_call.1} parent=5 // pred_fallthru
      _
    %p112 = scmp.le.s32.totalorder 1, %s8
    %p113 = scmp.lt.s32.totalorder %s8, 3
    %p114 = pnand %p112, %p113
    %p115 = pneg %p114
    // Predicated region
    $region25: #{tpu_custom_call.1} parent=5 // pred_check
      _
    $region26: #{tpu_custom_call.1} parent=5 // pred_check_branch
      %117 = sbr.rel (%p114) target = $region28
    $region27: #{tpu_custom_call.1} parent=5 // pred_region
      %s118 = ssub.s32 %s8, 1
      %s119 = smul.u32 32, %s13
      %p120 = scmp.lt.s32.totalorder %s119, 63
      %s121 = scalar_select %p120, %s119, 63
      %s122 = smul.addr %s121, 8
      %s123 = scalar_lea.vmem %s0, %s122
      %p124 = pneg %p34
      %p125 = pneg %p31
      %p126 = pneg %p55
      %p127 = pneg %p52
      %p128 = pneg %p81
      %p129 = pneg %p78
      %s130 = smul.u32 32, %s13
      %p131 = scmp.lt.s32.totalorder %s130, 63
      %s132 = scalar_select %p131, %s130, 63
      %s133 = smul.addr %s132, 8
      %s134 = scalar_lea.vmem %s2, %s133
      %s135 = smul.u32 32, %s13
      %p136 = scmp.lt.s32.totalorder %s135, 63
      %s137 = scalar_select %p136, %s135, 63
      %s138 = smul.addr %s137, 8
      %s139 = scalar_lea.vmem %s0, %s138
      %s140 = smul.u32 32, %s13
      %s141 = smul.u32 32, %s13
      %p142 = scmp.lt.s32.totalorder %s141, 63
      %s143 = scalar_select %p142, %s141, 63
      %s144 = smul.addr %s143, 8
      %s145 = scalar_lea.vmem %s2, %s144
      %s146 = smul.u32 32, %s13
      %v147 = vld [vmem:[%s139] sm:$0xff]
      %v148 = vld [vmem:[%s139 + $0x8] sm:$0xff]
      %v149 = vld [vmem:[%s139 + $0x10] sm:$0xff]
      %v150 = vld [vmem:[%s139 + $0x18] sm:$0xff]
      %v151 = vld [vmem:[%s139 + $0x20] sm:$0xff]
      %v152 = vld [vmem:[%s139 + $0x28] sm:$0xff]
      %v153 = vld [vmem:[%s139 + $0x30] sm:$0xff]
      %v154 = vld [vmem:[%s139 + $0x38] sm:$0xff]
      %v155 = vld [vmem:[%s139 + $0x40] sm:$0xff]
      %v156 = vld [vmem:[%s139 + $0x48] sm:$0xff]
      %v157 = vld [vmem:[%s139 + $0x50] sm:$0xff]
      %v158 = vld [vmem:[%s139 + $0x58] sm:$0xff]
      %v159 = vld [vmem:[%s139 + $0x60] sm:$0xff]
      %v160 = vld [vmem:[%s139 + $0x68] sm:$0xff]
      %v161 = vld [vmem:[%s139 + $0x70] sm:$0xff]
      %v162 = vld [vmem:[%s139 + $0x78] sm:$0xff]
      %v163 = vld [vmem:[%s139 + $0x80] sm:$0xff]
      %v164 = vld [vmem:[%s139 + $0x88] sm:$0xff]
      %v165 = vld [vmem:[%s139 + $0x90] sm:$0xff]
      %v166 = vld [vmem:[%s139 + $0x98] sm:$0xff]
      %v167 = vld [vmem:[%s139 + $0xa0] sm:$0xff]
      %v168 = vld [vmem:[%s139 + $0xa8] sm:$0xff]
      %v169 = vld [vmem:[%s139 + $0xb0] sm:$0xff]
      %v170 = vld [vmem:[%s139 + $0xb8] sm:$0xff]
      %v171 = vld [vmem:[%s139 + $0xc0] sm:$0xff]
      %v172 = vld [vmem:[%s139 + $0xc8] sm:$0xff]
      %v173 = vld [vmem:[%s139 + $0xd0] sm:$0xff]
      %v174 = vld [vmem:[%s139 + $0xd8] sm:$0xff]
      %v175 = vld [vmem:[%s139 + $0xe0] sm:$0xff]
      %v176 = vld [vmem:[%s139 + $0xe8] sm:$0xff]
      %v177 = vld [vmem:[%s139 + $0xf0] sm:$0xff]
      %v178 = vld [vmem:[%s139 + $0xf8] sm:$0xff]
      %v179 = vld [vmem:[%s1] sm:$0xff]
      %v180 = vld [vmem:[%s1 + $0x8] sm:$0xff]
      %v181 = vld [vmem:[%s1 + $0x10] sm:$0xff]
      %v182 = vld [vmem:[%s1 + $0x18] sm:$0xff]
      %vm183 = vcmask 261120
      %v185 = vsel %vm183, %v147, 0
      %v188 = vsel %vm183, %v148, 0
      %v191 = vsel %vm183, %v149, 0
      %v194 = vsel %vm183, %v150, 0
      %v197 = vsel %vm183, %v151, 0
      %v200 = vsel %vm183, %v152, 0
      %v203 = vsel %vm183, %v153, 0
      %v206 = vsel %vm183, %v154, 0
      %v209 = vsel %vm183, %v155, 0
      %v212 = vsel %vm183, %v156, 0
      %v215 = vsel %vm183, %v157, 0
      %v218 = vsel %vm183, %v158, 0
      %v221 = vsel %vm183, %v159, 0
      %v224 = vsel %vm183, %v160, 0
      %v227 = vsel %vm183, %v161, 0
      %v230 = vsel %vm183, %v162, 0
      %v233 = vsel %vm183, %v163, 0
      %v236 = vsel %vm183, %v164, 0
      %v239 = vsel %vm183, %v165, 0
      %v242 = vsel %vm183, %v166, 0
      %v245 = vsel %vm183, %v167, 0
      %v248 = vsel %vm183, %v168, 0
      %v251 = vsel %vm183, %v169, 0
      %v254 = vsel %vm183, %v170, 0
      %v257 = vsel %vm183, %v171, 0
      %v260 = vsel %vm183, %v172, 0
      %v263 = vsel %vm183, %v173, 0
      %v266 = vsel %vm183, %v174, 0
      %v269 = vsel %vm183, %v175, 0
      %v272 = vsel %vm183, %v176, 0
      %v275 = vsel %vm183, %v177, 0
      %v278 = vsel %vm183, %v178, 0
      %280 = vmatprep.subr.mxu0 0.0
      %281 = vmatpush1.msra.mxu0 0.0
      %282 = vmatprep.subr.mxu0 0.0
      %283 = vmatpush1.msra.mxu0 0.0
      %284 = vmatprep.subr.mxu0 0.0
      %285 = vmatpush1.msra.mxu0 0.0
      %286 = vmatprep.subr.mxu0 0.0
      %287 = vmatpush1.msra.mxu0 0.0
      %288 = vmatprep.subr.mxu0 0.0
      %289 = vmatpush1.msra.mxu0 0.0
      %290 = vmatprep.subr.mxu0 0.0
      %291 = vmatpush1.msra.mxu0 0.0
      %292 = vmatprep.subr.mxu0 0.0
      %293 = vmatpush1.msra.mxu0 0.0
      %294 = vmatprep.subr.mxu0 0.0
      %295 = vmatpush1.msra.mxu0 0.0
      %296 = vmatprep.subr.mxu0 0.0
      %297 = vmatpush1.msra.mxu0 0.0
      %298 = vmatprep.subr.mxu0 0.0
      %299 = vmatpush1.msra.mxu0 0.0
      %300 = vmatprep.subr.mxu0 0.0
      %301 = vmatpush1.msra.mxu0 0.0
      %302 = vmatprep.subr.mxu0 0.0
      %303 = vmatpush1.msra.mxu0 0.0
      %304 = vmatprep.subr.mxu0 0.0
      %305 = vmatpush1.msra.mxu0 %v182
      %306 = vmatprep.subr.mxu0 0.0
      %307 = vmatpush1.msra.mxu0 %v181
      %308 = vmatprep.subr.mxu0 0.0
      %309 = vmatpush1.msra.mxu0 %v180
      %310 = vmatprep.subr.mxu0 0.0
      %311 = vmatpush1.msra.mxu0 %v179
      %312 = vmatprep.subr.mxu0 0.0
      %313 = vmatpush2.msra.mxu0 0.0
      %314 = vmatprep.subr.mxu0 0.0
      %315 = vmatpush2.msra.mxu0 0.0
      %316 = vmatprep.subr.mxu0 0.0
      %317 = vmatpush2.msra.mxu0 0.0
      %318 = vmatprep.subr.mxu0 0.0
      %319 = vmatpush2.msra.mxu0 0.0
      %320 = vmatprep.subr.mxu0 0.0
      %321 = vmatpush2.msra.mxu0 0.0
      %322 = vmatprep.subr.mxu0 0.0
      %323 = vmatpush2.msra.mxu0 0.0
      %324 = vmatprep.subr.mxu0 0.0
      %325 = vmatpush2.msra.mxu0 0.0
      %326 = vmatprep.subr.mxu0 0.0
      %327 = vmatpush2.msra.mxu0 0.0
      %328 = vmatprep.subr.mxu0 0.0
      %329 = vmatpush2.msra.mxu0 0.0
      %330 = vmatprep.subr.mxu0 0.0
      %331 = vmatpush2.msra.mxu0 0.0
      %332 = vmatprep.subr.mxu0 0.0
      %333 = vmatpush2.msra.mxu0 0.0
      %334 = vmatprep.subr.mxu0 0.0
      %335 = vmatpush2.msra.mxu0 0.0
      %336 = vmatprep.subr.mxu0 0.0
      %337 = vmatpush2.msra.mxu0 0.0
      %338 = vmatprep.subr.mxu0 0.0
      %339 = vmatpush2.msra.mxu0 0.0
      %340 = vmatprep.subr.mxu0 0.0
      %341 = vmatpush2.msra.mxu0 0.0
      %342 = vmatprep.subr.mxu0 0.0
      %343 = vmatpush2.msra.mxu0 0.0
      %344 = vmatprep.mubr.f32.mxu0 0.0
      %345 = vmatmul.mubr.f32.gmra.mxu0 %v185
      %v346 = vpop.f32.mrf.mxu0
      %v347 = vadd.f32 0.0, %v346
      %v348 = vpop.f32.mrf.mxu0
      %349 = vmatprep.mubr.f32.mxu0 0.0
      %350 = vmatmul.mubr.f32.gmra.mxu0 %v188
      %v351 = vpop.f32.mrf.mxu0
      %v352 = vadd.f32 0.0, %v351
      %v353 = vpop.f32.mrf.mxu0
      %354 = vmatprep.mubr.f32.mxu0 0.0
      %355 = vmatmul.mubr.f32.gmra.mxu0 %v191
      %v356 = vpop.f32.mrf.mxu0
      %v357 = vadd.f32 0.0, %v356
      %v358 = vpop.f32.mrf.mxu0
      %359 = vmatprep.mubr.f32.mxu0 0.0
      %360 = vmatmul.mubr.f32.gmra.mxu0 %v194
      %v361 = vpop.f32.mrf.mxu0
      %v362 = vadd.f32 0.0, %v361
      %v363 = vpop.f32.mrf.mxu0
      %364 = vmatprep.mubr.f32.mxu0 0.0
      %365 = vmatmul.mubr.f32.gmra.mxu0 %v197
      %v366 = vpop.f32.mrf.mxu0
      %v367 = vadd.f32 0.0, %v366
      %v368 = vpop.f32.mrf.mxu0
      %369 = vmatprep.mubr.f32.mxu0 0.0
      %370 = vmatmul.mubr.f32.gmra.mxu0 %v200
      %v371 = vpop.f32.mrf.mxu0
      %v372 = vadd.f32 0.0, %v371
      %v373 = vpop.f32.mrf.mxu0
      %374 = vmatprep.mubr.f32.mxu0 0.0
      %375 = vmatmul.mubr.f32.gmra.mxu0 %v203
      %v376 = vpop.f32.mrf.mxu0
      %v377 = vadd.f32 0.0, %v376
      %v378 = vpop.f32.mrf.mxu0
      %379 = vmatprep.mubr.f32.mxu0 0.0
      %380 = vmatmul.mubr.f32.gmra.mxu0 %v206
      %v381 = vpop.f32.mrf.mxu0
      %v382 = vadd.f32 0.0, %v381
      %v383 = vpop.f32.mrf.mxu0
      %384 = vmatprep.mubr.f32.mxu0 0.0
      %385 = vmatmul.mubr.f32.gmra.mxu0 %v209
      %v386 = vpop.f32.mrf.mxu0
      %v387 = vadd.f32 0.0, %v386
      %v388 = vpop.f32.mrf.mxu0
      %389 = vmatprep.mubr.f32.mxu0 0.0
      %390 = vmatmul.mubr.f32.gmra.mxu0 %v212
      %v391 = vpop.f32.mrf.mxu0
      %v392 = vadd.f32 0.0, %v391
      %v393 = vpop.f32.mrf.mxu0
      %394 = vmatprep.mubr.f32.mxu0 0.0
      %395 = vmatmul.mubr.f32.gmra.mxu0 %v215
      %v396 = vpop.f32.mrf.mxu0
      %v397 = vadd.f32 0.0, %v396
      %v398 = vpop.f32.mrf.mxu0
      %399 = vmatprep.mubr.f32.mxu0 0.0
      %400 = vmatmul.mubr.f32.gmra.mxu0 %v218
      %v401 = vpop.f32.mrf.mxu0
      %v402 = vadd.f32 0.0, %v401
      %v403 = vpop.f32.mrf.mxu0
      %404 = vmatprep.mubr.f32.mxu0 0.0
      %405 = vmatmul.mubr.f32.gmra.mxu0 %v221
      %v406 = vpop.f32.mrf.mxu0
      %v407 = vadd.f32 0.0, %v406
      %v408 = vpop.f32.mrf.mxu0
      %409 = vmatprep.mubr.f32.mxu0 0.0
      %410 = vmatmul.mubr.f32.gmra.mxu0 %v224
      %v411 = vpop.f32.mrf.mxu0
      %v412 = vadd.f32 0.0, %v411
      %v413 = vpop.f32.mrf.mxu0
      %414 = vmatprep.mubr.f32.mxu0 0.0
      %415 = vmatmul.mubr.f32.gmra.mxu0 %v227
      %v416 = vpop.f32.mrf.mxu0
      %v417 = vadd.f32 0.0, %v416
      %v418 = vpop.f32.mrf.mxu0
      %419 = vmatprep.mubr.f32.mxu0 0.0
      %420 = vmatmul.mubr.f32.gmra.mxu0 %v230
      %v421 = vpop.f32.mrf.mxu0
      %v422 = vadd.f32 0.0, %v421
      %v423 = vpop.f32.mrf.mxu0
      %424 = vmatprep.mubr.f32.mxu0 0.0
      %425 = vmatmul.mubr.f32.gmra.mxu0 %v233
      %v426 = vpop.f32.mrf.mxu0
      %v427 = vadd.f32 0.0, %v426
      %v428 = vpop.f32.mrf.mxu0
      %429 = vmatprep.mubr.f32.mxu0 0.0
      %430 = vmatmul.mubr.f32.gmra.mxu0 %v236
      %v431 = vpop.f32.mrf.mxu0
      %v432 = vadd.f32 0.0, %v431
      %v433 = vpop.f32.mrf.mxu0
      %434 = vmatprep.mubr.f32.mxu0 0.0
      %435 = vmatmul.mubr.f32.gmra.mxu0 %v239
      %v436 = vpop.f32.mrf.mxu0
      %v437 = vadd.f32 0.0, %v436
      %v438 = vpop.f32.mrf.mxu0
      %439 = vmatprep.mubr.f32.mxu0 0.0
      %440 = vmatmul.mubr.f32.gmra.mxu0 %v242
      %v441 = vpop.f32.mrf.mxu0
      %v442 = vadd.f32 0.0, %v441
      %v443 = vpop.f32.mrf.mxu0
      %444 = vmatprep.mubr.f32.mxu0 0.0
      %445 = vmatmul.mubr.f32.gmra.mxu0 %v245
      %v446 = vpop.f32.mrf.mxu0
      %v447 = vadd.f32 0.0, %v446
      %v448 = vpop.f32.mrf.mxu0
      %449 = vmatprep.mubr.f32.mxu0 0.0
      %450 = vmatmul.mubr.f32.gmra.mxu0 %v248
      %v451 = vpop.f32.mrf.mxu0
      %v452 = vadd.f32 0.0, %v451
      %v453 = vpop.f32.mrf.mxu0
      %454 = vmatprep.mubr.f32.mxu0 0.0
      %455 = vmatmul.mubr.f32.gmra.mxu0 %v251
      %v456 = vpop.f32.mrf.mxu0
      %v457 = vadd.f32 0.0, %v456
      %v458 = vpop.f32.mrf.mxu0
      %459 = vmatprep.mubr.f32.mxu0 0.0
      %460 = vmatmul.mubr.f32.gmra.mxu0 %v254
      %v461 = vpop.f32.mrf.mxu0
      %v462 = vadd.f32 0.0, %v461
      %v463 = vpop.f32.mrf.mxu0
      %464 = vmatprep.mubr.f32.mxu0 0.0
      %465 = vmatmul.mubr.f32.gmra.mxu0 %v257
      %v466 = vpop.f32.mrf.mxu0
      %v467 = vadd.f32 0.0, %v466
      %v468 = vpop.f32.mrf.mxu0
      %469 = vmatprep.mubr.f32.mxu0 0.0
      %470 = vmatmul.mubr.f32.gmra.mxu0 %v260
      %v471 = vpop.f32.mrf.mxu0
      %v472 = vadd.f32 0.0, %v471
      %v473 = vpop.f32.mrf.mxu0
      %474 = vmatprep.mubr.f32.mxu0 0.0
      %475 = vmatmul.mubr.f32.gmra.mxu0 %v263
      %v476 = vpop.f32.mrf.mxu0
      %v477 = vadd.f32 0.0, %v476
      %v478 = vpop.f32.mrf.mxu0
      %479 = vmatprep.mubr.f32.mxu0 0.0
      %480 = vmatmul.mubr.f32.gmra.mxu0 %v266
      %v481 = vpop.f32.mrf.mxu0
      %v482 = vadd.f32 0.0, %v481
      %v483 = vpop.f32.mrf.mxu0
      %484 = vmatprep.mubr.f32.mxu0 0.0
      %485 = vmatmul.mubr.f32.gmra.mxu0 %v269
      %v486 = vpop.f32.mrf.mxu0
      %v487 = vadd.f32 0.0, %v486
      %v488 = vpop.f32.mrf.mxu0
      %489 = vmatprep.mubr.f32.mxu0 0.0
      %490 = vmatmul.mubr.f32.gmra.mxu0 %v272
      %v491 = vpop.f32.mrf.mxu0
      %v492 = vadd.f32 0.0, %v491
      %v493 = vpop.f32.mrf.mxu0
      %494 = vmatprep.mubr.f32.mxu0 0.0
      %495 = vmatmul.mubr.f32.gmra.mxu0 %v275
      %v496 = vpop.f32.mrf.mxu0
      %v497 = vadd.f32 0.0, %v496
      %v498 = vpop.f32.mrf.mxu0
      %499 = vmatprep.mubr.f32.mxu0 0.0
      %500 = vmatmul.mubr.f32.gmra.mxu0 %v278
      %v501 = vpop.f32.mrf.mxu0
      %v502 = vadd.f32 0.0, %v501
      %v503 = vpop.f32.mrf.mxu0
      %504 = vdwg.mxu0
      %vm505 = vcmask 523264
      %506 = vst.msk [vmem:[%s145] sm:$0xff] %vm505, %v347
      %507 = vst.msk [vmem:[%s145 + $0x8] sm:$0xff] %vm505, %v352
      %508 = vst.msk [vmem:[%s145 + $0x10] sm:$0xff] %vm505, %v357
      %509 = vst.msk [vmem:[%s145 + $0x18] sm:$0xff] %vm505, %v362
      %510 = vst.msk [vmem:[%s145 + $0x20] sm:$0xff] %vm505, %v367
      %511 = vst.msk [vmem:[%s145 + $0x28] sm:$0xff] %vm505, %v372
      %512 = vst.msk [vmem:[%s145 + $0x30] sm:$0xff] %vm505, %v377
      %513 = vst.msk [vmem:[%s145 + $0x38] sm:$0xff] %vm505, %v382
      %514 = vst.msk [vmem:[%s145 + $0x40] sm:$0xff] %vm505, %v387
      %515 = vst.msk [vmem:[%s145 + $0x48] sm:$0xff] %vm505, %v392
      %516 = vst.msk [vmem:[%s145 + $0x50] sm:$0xff] %vm505, %v397
      %517 = vst.msk [vmem:[%s145 + $0x58] sm:$0xff] %vm505, %v402
      %518 = vst.msk [vmem:[%s145 + $0x60] sm:$0xff] %vm505, %v407
      %519 = vst.msk [vmem:[%s145 + $0x68] sm:$0xff] %vm505, %v412
      %520 = vst.msk [vmem:[%s145 + $0x70] sm:$0xff] %vm505, %v417
      %521 = vst.msk [vmem:[%s145 + $0x78] sm:$0xff] %vm505, %v422
      %522 = vst.msk [vmem:[%s145 + $0x80] sm:$0xff] %vm505, %v427
      %523 = vst.msk [vmem:[%s145 + $0x88] sm:$0xff] %vm505, %v432
      %524 = vst.msk [vmem:[%s145 + $0x90] sm:$0xff] %vm505, %v437
      %525 = vst.msk [vmem:[%s145 + $0x98] sm:$0xff] %vm505, %v442
      %526 = vst.msk [vmem:[%s145 + $0xa0] sm:$0xff] %vm505, %v447
      %527 = vst.msk [vmem:[%s145 + $0xa8] sm:$0xff] %vm505, %v452
      %528 = vst.msk [vmem:[%s145 + $0xb0] sm:$0xff] %vm505, %v457
      %529 = vst.msk [vmem:[%s145 + $0xb8] sm:$0xff] %vm505, %v462
      %530 = vst.msk [vmem:[%s145 + $0xc0] sm:$0xff] %vm505, %v467
      %531 = vst.msk [vmem:[%s145 + $0xc8] sm:$0xff] %vm505, %v472
      %532 = vst.msk [vmem:[%s145 + $0xd0] sm:$0xff] %vm505, %v477
      %533 = vst.msk [vmem:[%s145 + $0xd8] sm:$0xff] %vm505, %v482
      %534 = vst.msk [vmem:[%s145 + $0xe0] sm:$0xff] %vm505, %v487
      %535 = vst.msk [vmem:[%s145 + $0xe8] sm:$0xff] %vm505, %v492
      %536 = vst.msk [vmem:[%s145 + $0xf0] sm:$0xff] %vm505, %v497
      %537 = vst.msk [vmem:[%s145 + $0xf8] sm:$0xff] %vm505, %v502
      %s538 = smul.u32 32, %s13
      %p539 = scmp.lt.s32.totalorder %s538, 63
      %s540 = scalar_select %p539, %s538, 63
      %s541 = smul.addr %s540, 8
      %s542 = scalar_lea.vmem %s2, %s541
      // Predicated region
      $region29: #{tpu_custom_call.1} parent=27 // pred_check
        %p543 = pneg %p78
      $region30: #{tpu_custom_call.1} parent=27 // pred_check_branch
        %545 = sbr.rel (%p543) target = $region32
      $region31: #{tpu_custom_call.1} parent=27 // pred_region
        %s546 = smul.u32 32, %s13
      $region32: #{tpu_custom_call.1} parent=27 // pred_fallthru
        _
    $region28: #{tpu_custom_call.1} parent=5 // pred_fallthru
      _
    %p547 = scmp.le.s32.totalorder 2, %s8
    // Predicated region
    $region33: #{tpu_custom_call.1} parent=5 // pred_check
      %p548 = pneg %p547
    $region34: #{tpu_custom_call.1} parent=5 // pred_check_branch
      %550 = sbr.rel (%p548) target = $region36
    $region35: #{tpu_custom_call.1} parent=5 // pred_region
      %s551 = ssub.s32 %s8, 2
      // Predicated region
      $region37: #{tpu_custom_call.1} parent=35 // pred_check
        %p552 = pneg %p84
      $region38: #{tpu_custom_call.1} parent=35 // pred_check_branch
        %554 = sbr.rel (%p552) target = $region40
      $region39: #{tpu_custom_call.1} parent=35 // pred_region
        %s555 = smul.u32 32, %s14
        %p556 = scmp.lt.s32.totalorder %s555, 63
        %s557 = scalar_select %p556, %s555, 63
        %s558 = smul.addr %s557, 8
        %s559 = scalar_lea.vmem %s2, %s558
      $region40: #{tpu_custom_call.1} parent=35 // pred_fallthru
        _
    $region36: #{tpu_custom_call.1} parent=5 // pred_fallthru
      _
  $region6: #{tpu_custom_call.1} parent=0 // loop_footer
    %s12 = sadd.s32 1, %s8
  $region7: #{tpu_custom_call.1} parent=0 // loop_footer_branch
    %7 = sbr.rel target = $region3
  $region8: #{tpu_custom_call.1} parent=0 // loop_exit
    _

</llo_original>
